<compile_context>
chip_gen: v7x
topology: tpu7x:2x2x1
jax: 0.10.0
libtpu: 0.0.40
codegen_flags: <defaults>
</compile_context>

<pallas_src>
import functools

import jax
import jax.numpy as jnp
from jax.experimental import pallas as pl
from jax.experimental.pallas import tpu as pltpu

NEG_SLOPE = 0.01  # F.leaky_relu default negative_slope


def _leaky_relu(y):
    return jnp.where(y > 0, y, NEG_SLOPE * y)


def _round_up(x, m):
    return ((x + m - 1) // m) * m


@functools.lru_cache(maxsize=1)
def _device_kind():
    try:
        return jax.devices()[0].device_kind.lower()
    except Exception:
        return ""


def _num_tensorcores():
    # v7x has 2 TensorCores per chip; v5e/v6e have 1.
    return 2 if "v7" in _device_kind() else 1


def _vmem_ceiling_bytes():
    # v7x: only 64 MiB physical VMEM -> cap well under. v5e/v6e: 128 MiB.
    return (48 << 20) if "v7" in _device_kind() else (100 << 20)


def _fused_mlp_kernel(x_ref, *refs, compute_dtype):
    """refs = (*w_refs, o_ref). All layers computed on-chip for one row tile."""
    w_refs, o_ref = refs[:-1], refs[-1]
    # x arrives as f32; cast to bf16 in-kernel (free VPU work under the MXU),
    # so HBM only carries x once instead of a cast pass + a kernel read.
    h = x_ref[...].astype(compute_dtype)
    y = None
    for w_ref in w_refs:
        y = jnp.dot(h, w_ref[...], preferred_element_type=jnp.float32)
        y = _leaky_relu(y)                 # f32
        h = y.astype(compute_dtype)        # bf16 feed for the next MXU pass
    o_ref[...] = y.astype(o_ref.dtype)     # last activation


def _choose_tiling(M, max_tm, min_tiles):
    """Adaptive row tiling: multiple-of-16 tiles, minimal padding, and at least
    `min_tiles` grid steps (when the batch permits) so the 'parallel' axis can
    shard across v7x's two TensorCores."""
    m_pad = _round_up(max(M, 16), 16)
    n_tiles = pl.cdiv(m_pad, max_tm)
    if min_tiles > 1 and m_pad >= min_tiles * 16:
        n_tiles = max(n_tiles, min_tiles)
    tm = _round_up(pl.cdiv(m_pad, n_tiles), 16)
    m_pad = _round_up(m_pad, tm)
    return m_pad, tm


def mlp_forward_pallas(x, weights_t, *, compute_dtype=jnp.bfloat16,
                       out_dtype=jnp.float32, max_tm=1024):
    """x: (M, K0) f32; weights_t: list of (in_dim, out_dim) matrices (pre-transposed,
    ideally pre-cast to compute_dtype). Returns leaky_relu(...(x @ W0)...@ Wn)."""
    M, K0 = x.shape
    assert weights_t, "need at least one layer"
    assert weights_t[0].shape[0] == K0
    for a, b in zip(weights_t[:-1], weights_t[1:]):
        assert a.shape[1] == b.shape[0]
    n_out = weights_t[-1].shape[1]

    m_pad, tm = _choose_tiling(M, max_tm, _num_tensorcores())
    if m_pad != M:
        x = jnp.pad(x, ((0, m_pad - M), (0, 0)))

    # No-op when the caller pre-cast the weights once outside the hot path.
    ws = [w if w.dtype == compute_dtype else w.astype(compute_dtype)
          for w in weights_t]

    w_isz = jnp.dtype(compute_dtype).itemsize
    o_isz = jnp.dtype(out_dtype).itemsize
    x_isz = jnp.dtype(x.dtype).itemsize
    weight_bytes = sum(int(w.size) * w_isz for w in ws)
    # Single-buffered weights + double-buffered x / out row tiles.
    vmem_needed = weight_bytes + 2 * tm * K0 * x_isz + 2 * tm * n_out * o_isz
    ceiling = _vmem_ceiling_bytes()
    assert vmem_needed <= ceiling, (
        f"VMEM footprint {vmem_needed}B exceeds {ceiling}B; shrink max_tm or layer widths")
    vmem_limit = int(min(ceiling, max(vmem_needed + (4 << 20), 16 << 20)))

    flops = 2 * m_pad * sum(int(w.shape[0]) * int(w.shape[1]) for w in ws)
    bytes_accessed = m_pad * K0 * x_isz + weight_bytes + m_pad * n_out * o_isz

    grid = (m_pad // tm,)
    in_specs = [pl.BlockSpec((tm, K0), lambda i: (i, 0))]
    # Full-array, VMEM-resident weights; constant index_map -> single buffer.
    in_specs += [
        pl.BlockSpec(w.shape, lambda i: (0, 0), pipeline_mode=pl.Buffered(1))
        for w in ws
    ]
    out_specs = pl.BlockSpec((tm, n_out), lambda i: (i, 0))

    out = pl.pallas_call(
        functools.partial(_fused_mlp_kernel, compute_dtype=compute_dtype),
        out_shape=jax.ShapeDtypeStruct((m_pad, n_out), out_dtype),
        grid_spec=pltpu.PrefetchScalarGridSpec(
            num_scalar_prefetch=0,
            grid=grid,
            in_specs=in_specs,
            out_specs=out_specs,
        ),
        compiler_params=pltpu.CompilerParams(
            dimension_semantics=("parallel",),
            vmem_limit_bytes=vmem_limit,
        ),
        cost_estimate=pl.CostEstimate(
            flops=flops, transcendentals=0, bytes_accessed=bytes_accessed),
    )(x, *ws)
    return out[:M] if m_pad != M else out


@functools.partial(jax.jit, static_argnames=("compute_dtype", "out_dtype", "max_tm"))
def mlp_forward(x, weights_t, *, compute_dtype=jnp.bfloat16,
                out_dtype=jnp.float32, max_tm=1024):
    return mlp_forward_pallas(x, weights_t, compute_dtype=compute_dtype,
                              out_dtype=out_dtype, max_tm=max_tm)


def init_mlp_weights(key, dims):
    """PyTorch-convention (out_dim, in_dim) weights matching nn.Linear(..., bias=False)."""
    weights = []
    for i in range(1, len(dims)):
        key, sub = jax.random.split(key)
        bound = 1.0 / jnp.sqrt(dims[i - 1])
        w = jax.random.uniform(
            sub, (dims[i], dims[i - 1]), jnp.float32, minval=-bound, maxval=bound)
        weights.append(w)
    return weights


def prepare_weights(weights, compute_dtype=jnp.bfloat16):
    """One-time (out,in)->(in,out) transpose + bf16 cast, outside the hot path."""
    return [jnp.asarray(w.T, dtype=compute_dtype) for w in weights]


if __name__ == "__main__":
    dims = [128, 256, 128]      # MLP dims (dims[0] = input feature size)
    batch = 16

    key = jax.random.PRNGKey(0)
    kx, kw = jax.random.split(key)
    x = jax.random.normal(kx, (batch, dims[0]), jnp.float32)
    weights = init_mlp_weights(kw, dims)           # (out, in), PyTorch layout
    weights_t = prepare_weights(weights)           # (in, out), bf16, done once

    out = mlp_forward(x, weights_t)
    out = jax.block_until_ready(out)

    # Reference with the same precision pipeline (bf16 MXU inputs, f32 accumulate).
    h = x.astype(jnp.bfloat16)
    ref_bf = None
    for wt in weights_t:
        ref_bf = _leaky_relu(jnp.dot(h, wt, preferred_element_type=jnp.float32))
        h = ref_bf.astype(jnp.bfloat16)

    # Loose check vs. the pure-f32 PyTorch-equivalent forward.
    ref_f32 = x
    for w in weights:
        ref_f32 = _leaky_relu(ref_f32 @ w.T)

    assert out.shape == (batch, dims[-1])
    assert out.dtype == jnp.float32
    assert jnp.allclose(out, ref_bf, atol=3e-3, rtol=3e-3)
    assert jnp.allclose(out, ref_f32, atol=5e-2, rtol=5e-2)

    print("KERNEL_OK")
</pallas_src>

<mosaic_0001>
module attributes {stable_mosaic.version = 11 : i64} {
  func.func @_fused_mlp_kernel(%arg0: i32, %arg1: memref<16x128xf32, #tpu.memory_space<vmem>>, %arg2: memref<128x256xbf16, #tpu.memory_space<vmem>>, %arg3: memref<256x128xbf16, #tpu.memory_space<vmem>>, %arg4: memref<16x128xf32, #tpu.memory_space<vmem>>) attributes {dimension_semantics = [#tpu.dimension_semantics<parallel>], iteration_bounds = array<i64: 1>, scalar_prefetch = 0 : i64, scratch_operands = 0 : i64, tpu.core_type = #tpu.core_type<tc>, window_params = [{transform_indices = @transform_0, window_bounds = array<i64: 16, 128>}, {pipeline_mode = #tpu.pipeline_mode<synchronous>, transform_indices = @transform_1, window_bounds = array<i64: 128, 256>}, {pipeline_mode = #tpu.pipeline_mode<synchronous>, transform_indices = @transform_2, window_bounds = array<i64: 256, 128>}, {transform_indices = @transform_3, window_bounds = array<i64: 16, 128>}]} {
    %c0 = arith.constant 0 : index
    %c0_0 = arith.constant 0 : index
    %0 = vector.load %arg1[%c0, %c0_0] : memref<16x128xf32, #tpu.memory_space<vmem>>, vector<16x128xf32>
    %1 = arith.truncf %0 : vector<16x128xf32> to vector<16x128xbf16>
    %c0_1 = arith.constant 0 : index
    %c0_2 = arith.constant 0 : index
    %2 = vector.load %arg2[%c0_1, %c0_2] : memref<128x256xbf16, #tpu.memory_space<vmem>>, vector<128x256xbf16>
    %cst = arith.constant dense<0.000000e+00> : vector<16x256xf32>
    %3 = tpu.matmul %1, %2, %cst {dimension_numbers = #tpu.dot_dimension_numbers<[1], [0], [0], [1], [0, 0, 1, 1], [], []>} : vector<16x128xbf16>, vector<128x256xbf16>, vector<16x256xf32> -> vector<16x256xf32>
    %cst_3 = arith.constant 0.000000e+00 : f32
    %4 = vector.broadcast %cst_3 : f32 to vector<16x256xf32>
    %5 = arith.cmpf ogt, %3, %4 : vector<16x256xf32>
    %cst_4 = arith.constant 0.00999999977 : f32
    %6 = vector.broadcast %cst_4 : f32 to vector<16x256xf32>
    %7 = arith.mulf %6, %3 : vector<16x256xf32>
    %8 = arith.select %5, %3, %7 : vector<16x256xi1>, vector<16x256xf32>
    %9 = arith.truncf %8 : vector<16x256xf32> to vector<16x256xbf16>
    %c0_5 = arith.constant 0 : index
    %c0_6 = arith.constant 0 : index
    %10 = vector.load %arg3[%c0_5, %c0_6] : memref<256x128xbf16, #tpu.memory_space<vmem>>, vector<256x128xbf16>
    %cst_7 = arith.constant dense<0.000000e+00> : vector<16x128xf32>
    %11 = tpu.matmul %9, %10, %cst_7 {dimension_numbers = #tpu.dot_dimension_numbers<[1], [0], [0], [1], [0, 0, 1, 1], [], []>} : vector<16x256xbf16>, vector<256x128xbf16>, vector<16x128xf32> -> vector<16x128xf32>
    %cst_8 = arith.constant 0.000000e+00 : f32
    %12 = vector.broadcast %cst_8 : f32 to vector<16x128xf32>
    %13 = arith.cmpf ogt, %11, %12 : vector<16x128xf32>
    %cst_9 = arith.constant 0.00999999977 : f32
    %14 = vector.broadcast %cst_9 : f32 to vector<16x128xf32>
    %15 = arith.mulf %14, %11 : vector<16x128xf32>
    %16 = arith.select %13, %11, %15 : vector<16x128xi1>, vector<16x128xf32>
    %c0_10 = arith.constant 0 : index
    %c0_11 = arith.constant 0 : index
    %17 = vector.load %arg4[%c0_10, %c0_11] : memref<16x128xf32, #tpu.memory_space<vmem>>, vector<16x128xf32>
    tpu.vector_store %arg4[%c0_10, %c0_11], %16 {strides = array<i32>} : memref<16x128xf32, #tpu.memory_space<vmem>>, vector<16x128xf32>,
    return
  }
  func.func @transform_0(%arg0: i32) -> (i32, i32) {
    %c0_i32 = arith.constant 0 : i32
    %c0_i32_0 = arith.constant 0 : i32
    return %arg0, %c0_i32 : i32, i32
  }
  func.func @transform_1(%arg0: i32) -> (i32, i32) {
    %c0_i32 = arith.constant 0 : i32
    %c0_i32_0 = arith.constant 0 : i32
    %c0_i32_1 = arith.constant 0 : i32
    return %c0_i32, %c0_i32_0 : i32, i32
  }
  func.func @transform_2(%arg0: i32) -> (i32, i32) {
    %c0_i32 = arith.constant 0 : i32
    %c0_i32_0 = arith.constant 0 : i32
    %c0_i32_1 = arith.constant 0 : i32
    return %c0_i32, %c0_i32_0 : i32, i32
  }
  func.func @transform_3(%arg0: i32) -> (i32, i32) {
    %c0_i32 = arith.constant 0 : i32
    %c0_i32_0 = arith.constant 0 : i32
    return %arg0, %c0_i32 : i32, i32
  }
}

</mosaic_0001>

<llo_original>
// kernel: mlp_forward.1
$region0: #{mlp_forward.1}
  #allocation0 [shape = 'u32[]', space=smem, size = 0x4, offset = 0x4, fixed_abs, tag = 'smem constant byte address 0x4 - core index']
  #allocation1 [shape = 'u32[144,128]{1,0:T(1,128)}', space=vmem, size = 0x12000, scoped, tag = 'internal scratch']
  %s0 = inlined_call_operand.hbm [shape: f32[16,128], index: 0, kind: input, shape index: {}]
  %s1 = inlined_call_operand.hbm [shape: bf16[128,256], index: 1, kind: input, shape index: {}]
  %s2 = inlined_call_operand.hbm [shape: bf16[256,128], index: 2, kind: input, shape index: {}]
  %s3 = inlined_call_operand.hbm [shape: f32[16,128], index: 3, kind: output, shape index: {}]
  %s4 = sld [smem:[#allocation0]]
  $region34: #{mlp_forward.1} parent=0
    _
  %s6 = ssub.s32 1, %s4
  %s7 = scalar_select 0, %s6, %s4
  $region1: #{mlp_forward.1} parent=0
    #allocation2 [shape = 'u8[8192]{0}', space=vmem, size = 0x2000, scoped, tag = 'input window, operand 0, single buffered']
    #allocation3 [shape = 's32[1]{0}', space=sflag, size = 0x4, scoped, tag = 'scoped memory for mlp_forward.1']
    #allocation4 [shape = 's32[1]{0}', space=sflag, size = 0x4, scoped, tag = 'scoped memory for mlp_forward.1']
    #allocation5 [shape = 'u8[65536]{0}', space=vmem, size = 0x10000, scoped, tag = 'input window, operand 1, single buffered']
    #allocation6 [shape = 's32[1]{0}', space=sflag, size = 0x4, scoped, tag = 'scoped memory for mlp_forward.1']
    #allocation7 [shape = 'u8[65536]{0}', space=vmem, size = 0x10000, scoped, tag = 'input window, operand 2, single buffered']
    #allocation8 [shape = 'u8[8192]{0}', space=vmem, size = 0x2000, scoped, tag = 'output window, operand 0, single buffered']
    %8 = vsyncpa [#allocation3], 0
    %9 = vsyncpa [#allocation6], 0
    %10 = vsyncpa [#allocation4], 0
    // Predicated region
    $region2: #{mlp_forward.1} parent=1 // pred_check
      _
    $region3: #{mlp_forward.1} parent=1 // pred_check_branch
      %12 = sbr.rel (0) target = $region5
    $region4: #{mlp_forward.1} parent=1 // pred_region
      %s14 = ssub.s32 256, 256
      %15 = vsyncadd [#allocation3], %s14
      %s16 = sshll.u32 [#allocation2], 4
      %s17 = int_to_ptr.vmem [resolvable:$true] %s16
      %22 = dma.hbm_to_vmem [thread:$0]  %s0, 256, %s17, [#allocation3], 128, 128, 8
    $region5: #{mlp_forward.1} parent=1 // pred_fallthru
      _
    // Predicated region
    $region6: #{mlp_forward.1} parent=1 // pred_check
      _
    $region7: #{mlp_forward.1} parent=1 // pred_check_branch
      %24 = sbr.rel (0) target = $region9
    $region8: #{mlp_forward.1} parent=1 // pred_region
      %s26 = ssub.s32 2048, 2048
      %27 = vsyncadd [#allocation6], %s26
      %s28 = sshll.u32 [#allocation5], 4
      %s29 = int_to_ptr.vmem [resolvable:$true] %s28
      %34 = dma.hbm_to_vmem [thread:$0]  %s1, 2048, %s29, [#allocation6], 128, 128, 8
    $region9: #{mlp_forward.1} parent=1 // pred_fallthru
      _
    // Predicated region
    $region10: #{mlp_forward.1} parent=1 // pred_check
      _
    $region11: #{mlp_forward.1} parent=1 // pred_check_branch
      %36 = sbr.rel (0) target = $region13
    $region12: #{mlp_forward.1} parent=1 // pred_region
      %s38 = ssub.s32 2048, 2048
      %39 = vsyncadd [#allocation6], %s38
      %s40 = sshll.u32 [#allocation7], 4
      %s41 = int_to_ptr.vmem [resolvable:$true] %s40
      %46 = dma.hbm_to_vmem [thread:$0]  %s2, 2048, %s41, [#allocation6], 64, 64, 4
    $region13: #{mlp_forward.1} parent=1 // pred_fallthru
      _
    // Predicated region
    $region14: #{mlp_forward.1} parent=1 // pred_check
      _
    $region15: #{mlp_forward.1} parent=1 // pred_check_branch
      %48 = sbr.rel (0) target = $region17
    $region16: #{mlp_forward.1} parent=1 // pred_region
      %49 = dma.done [#allocation3], 256
    $region17: #{mlp_forward.1} parent=1 // pred_fallthru
      _
    // Predicated region
    $region18: #{mlp_forward.1} parent=1 // pred_check
      _
    $region19: #{mlp_forward.1} parent=1 // pred_check_branch
      %51 = sbr.rel (0) target = $region21
    $region20: #{mlp_forward.1} parent=1 // pred_region
      %52 = dma.done [#allocation6], 2048
    $region21: #{mlp_forward.1} parent=1 // pred_fallthru
      _
    // Predicated region
    $region22: #{mlp_forward.1} parent=1 // pred_check
      _
    $region23: #{mlp_forward.1} parent=1 // pred_check_branch
      %54 = sbr.rel (0) target = $region25
    $region24: #{mlp_forward.1} parent=1 // pred_region
      %55 = dma.done [#allocation6], 2048
    $region25: #{mlp_forward.1} parent=1 // pred_fallthru
      _
    %v57 = vld [vmem:[#allocation2] sm:$0xff]
    %v58 = vld [vmem:[#allocation2 + $0x8] sm:$0xff]
    %v59 = vpack.c.bf16 %v58, %v57
    %v60 = vld [vmem:[#allocation5] sm:$0xff]
    %v61 = vld [vmem:[#allocation5 + $0x8] sm:$0xff]
    %v62 = vld [vmem:[#allocation5 + $0x10] sm:$0xff]
    %v63 = vld [vmem:[#allocation5 + $0x18] sm:$0xff]
    %v64 = vld [vmem:[#allocation5 + $0x20] sm:$0xff]
    %v65 = vld [vmem:[#allocation5 + $0x28] sm:$0xff]
    %v66 = vld [vmem:[#allocation5 + $0x30] sm:$0xff]
    %v67 = vld [vmem:[#allocation5 + $0x38] sm:$0xff]
    %v68 = vld [vmem:[#allocation5 + $0x40] sm:$0xff]
    %v69 = vld [vmem:[#allocation5 + $0x48] sm:$0xff]
    %v70 = vld [vmem:[#allocation5 + $0x50] sm:$0xff]
    %v71 = vld [vmem:[#allocation5 + $0x58] sm:$0xff]
    %v72 = vld [vmem:[#allocation5 + $0x60] sm:$0xff]
    %v73 = vld [vmem:[#allocation5 + $0x68] sm:$0xff]
    %v74 = vld [vmem:[#allocation5 + $0x70] sm:$0xff]
    %v75 = vld [vmem:[#allocation5 + $0x78] sm:$0xff]
    %v92 = vunpack.c.l.b16 %v60
    %v93 = vunpack.c.h.b16 %v60
    %v94 = vunpack.c.l.b16 %v61
    %v95 = vunpack.c.h.b16 %v61
    %v96 = vunpack.c.l.b16 %v62
    %v97 = vunpack.c.h.b16 %v62
    %v98 = vunpack.c.l.b16 %v63
    %v99 = vunpack.c.h.b16 %v63
    %v100 = vunpack.c.l.b16 %v64
    %v101 = vunpack.c.h.b16 %v64
    %v102 = vunpack.c.l.b16 %v65
    %v103 = vunpack.c.h.b16 %v65
    %v104 = vunpack.c.l.b16 %v66
    %v105 = vunpack.c.h.b16 %v66
    %v106 = vunpack.c.l.b16 %v67
    %v107 = vunpack.c.h.b16 %v67
    %v108 = vunpack.c.l.b16 %v68
    %v109 = vunpack.c.h.b16 %v68
    %v110 = vunpack.c.l.b16 %v69
    %v111 = vunpack.c.h.b16 %v69
    %v112 = vunpack.c.l.b16 %v70
    %v113 = vunpack.c.h.b16 %v70
    %v114 = vunpack.c.l.b16 %v71
    %v115 = vunpack.c.h.b16 %v71
    %v116 = vunpack.c.l.b16 %v72
    %v117 = vunpack.c.h.b16 %v72
    %v118 = vunpack.c.l.b16 %v73
    %v119 = vunpack.c.h.b16 %v73
    %v120 = vunpack.c.l.b16 %v74
    %v121 = vunpack.c.h.b16 %v74
    %v122 = vunpack.c.l.b16 %v75
    %v123 = vunpack.c.h.b16 %v75
    %v124 = vpack.c.b16 %v94, %v92
    %v125 = vpack.c.b16 %v95, %v93
    %v126 = vpack.c.b16 %v98, %v96
    %v127 = vpack.c.b16 %v99, %v97
    %v128 = vpack.c.b16 %v102, %v100
    %v129 = vpack.c.b16 %v103, %v101
    %v130 = vpack.c.b16 %v106, %v104
    %v131 = vpack.c.b16 %v107, %v105
    %v132 = vpack.c.b16 %v110, %v108
    %v133 = vpack.c.b16 %v111, %v109
    %v134 = vpack.c.b16 %v114, %v112
    %v135 = vpack.c.b16 %v115, %v113
    %v136 = vpack.c.b16 %v118, %v116
    %v137 = vpack.c.b16 %v119, %v117
    %v138 = vpack.c.b16 %v122, %v120
    %v139 = vpack.c.b16 %v123, %v121
    %156 = vmatprep.subr.bf16.mxu0 %v125
    %157 = vmatpush1.bf16.msra.mxu0 %v124
    %158 = vmatprep.subr.bf16.mxu0 %v127
    %159 = vmatpush1.bf16.msra.mxu0 %v126
    %160 = vmatprep.subr.bf16.mxu0 %v129
    %161 = vmatpush1.bf16.msra.mxu0 %v128
    %162 = vmatprep.subr.bf16.mxu0 %v131
    %163 = vmatpush1.bf16.msra.mxu0 %v130
    %164 = vmatprep.subr.bf16.mxu0 %v133
    %165 = vmatpush1.bf16.msra.mxu0 %v132
    %166 = vmatprep.subr.bf16.mxu0 %v135
    %167 = vmatpush1.bf16.msra.mxu0 %v134
    %168 = vmatprep.subr.bf16.mxu0 %v137
    %169 = vmatpush1.bf16.msra.mxu0 %v136
    %170 = vmatprep.subr.bf16.mxu0 %v139
    %171 = vmatpush1.bf16.msra.mxu0 %v138
    %172 = vmatprep.subr.bf16.mxu0 0
    %173 = vmatpush1.bf16.msra.mxu0 0
    %174 = vmatprep.subr.bf16.mxu0 0
    %175 = vmatpush1.bf16.msra.mxu0 0
    %176 = vmatprep.subr.bf16.mxu0 0
    %177 = vmatpush1.bf16.msra.mxu0 0
    %178 = vmatprep.subr.bf16.mxu0 0
    %179 = vmatpush1.bf16.msra.mxu0 0
    %180 = vmatprep.subr.bf16.mxu0 0
    %181 = vmatpush1.bf16.msra.mxu0 0
    %182 = vmatprep.subr.bf16.mxu0 0
    %183 = vmatpush1.bf16.msra.mxu0 0
    %184 = vmatprep.subr.bf16.mxu0 0
    %185 = vmatpush1.bf16.msra.mxu0 0
    %186 = vmatprep.subr.bf16.mxu0 0
    %187 = vmatpush1.bf16.msra.mxu0 0
    %188 = vmatprep.mubr.bf16.mxu0 0
    %189 = vmatmul.mubr.bf16.gmra.mrb[0].mxu0 %v59
    %v190 = vpop.f32.mrb[0].mxu0
    %v191 = vadd.f32 0.0, %v190
    %v192 = vpop.f32.mrb[0].mxu0
    %v193 = vadd.f32 0.0, %v192
    %v194 = vpop.f32.mrb[0].mxu0
    %v195 = vadd.f32 0.0, %v194
    %v196 = vpop.f32.mrb[0].mxu0
    %v197 = vadd.f32 0.0, %v196
    %198 = vdwg.mxu0
    %vm199 = vcmp.gt.f32.partialorder %v191, 0.0
    %vm200 = vcmp.gt.f32.partialorder %v193, 0.0
    %vm201 = vcmp.gt.f32.partialorder %v195, 0.0
    %vm202 = vcmp.gt.f32.partialorder %v197, 0.0
    %v203 = vmul.f32 %v191, 0.01
    %v204 = vmul.f32 %v193, 0.01
    %v205 = vmul.f32 %v195, 0.01
    %v206 = vmul.f32 %v197, 0.01
    %v207 = vsel %vm199, %v191, %v203
    %v208 = vsel %vm200, %v193, %v204
    %v209 = vsel %vm201, %v195, %v205
    %v210 = vsel %vm202, %v197, %v206
    %v211 = vpack.c.bf16 %v209, %v207
    %v212 = vpack.c.bf16 %v210, %v208
    %v213 = vld [vmem:[#allocation7] sm:$0xf]
    %v214 = vld [vmem:[#allocation7 + $0x4] sm:$0xf]
    %v215 = vld [vmem:[#allocation7 + $0x8] sm:$0xf]
    %v216 = vld [vmem:[#allocation7 + $0xc] sm:$0xf]
    %v217 = vld [vmem:[#allocation7 + $0x10] sm:$0xf]
    %v218 = vld [vmem:[#allocation7 + $0x14] sm:$0xf]
    %v219 = vld [vmem:[#allocation7 + $0x18] sm:$0xf]
    %v220 = vld [vmem:[#allocation7 + $0x1c] sm:$0xf]
    %v221 = vld [vmem:[#allocation7 + $0x20] sm:$0xf]
    %v222 = vld [vmem:[#allocation7 + $0x24] sm:$0xf]
    %v223 = vld [vmem:[#allocation7 + $0x28] sm:$0xf]
    %v224 = vld [vmem:[#allocation7 + $0x2c] sm:$0xf]
    %v225 = vld [vmem:[#allocation7 + $0x30] sm:$0xf]
    %v226 = vld [vmem:[#allocation7 + $0x34] sm:$0xf]
    %v227 = vld [vmem:[#allocation7 + $0x38] sm:$0xf]
    %v228 = vld [vmem:[#allocation7 + $0x3c] sm:$0xf]
    %v229 = vld [vmem:[#allocation7 + $0x40] sm:$0xf]
    %v230 = vld [vmem:[#allocation7 + $0x44] sm:$0xf]
    %v231 = vld [vmem:[#allocation7 + $0x48] sm:$0xf]
    %v232 = vld [vmem:[#allocation7 + $0x4c] sm:$0xf]
    %v233 = vld [vmem:[#allocation7 + $0x50] sm:$0xf]
    %v234 = vld [vmem:[#allocation7 + $0x54] sm:$0xf]
    %v235 = vld [vmem:[#allocation7 + $0x58] sm:$0xf]
    %v236 = vld [vmem:[#allocation7 + $0x5c] sm:$0xf]
    %v237 = vld [vmem:[#allocation7 + $0x60] sm:$0xf]
    %v238 = vld [vmem:[#allocation7 + $0x64] sm:$0xf]
    %v239 = vld [vmem:[#allocation7 + $0x68] sm:$0xf]
    %v240 = vld [vmem:[#allocation7 + $0x6c] sm:$0xf]
    %v241 = vld [vmem:[#allocation7 + $0x70] sm:$0xf]
    %v242 = vld [vmem:[#allocation7 + $0x74] sm:$0xf]
    %v243 = vld [vmem:[#allocation7 + $0x78] sm:$0xf]
    %v244 = vld [vmem:[#allocation7 + $0x7c] sm:$0xf]
    %v277 = vunpack.c.l.b16 %v213
    %v278 = vunpack.c.l.b16 %v214
    %v279 = vunpack.c.l.b16 %v215
    %v280 = vunpack.c.l.b16 %v216
    %v281 = vunpack.c.l.b16 %v217
    %v282 = vunpack.c.l.b16 %v218
    %v283 = vunpack.c.l.b16 %v219
    %v284 = vunpack.c.l.b16 %v220
    %v285 = vunpack.c.l.b16 %v221
    %v286 = vunpack.c.l.b16 %v222
    %v287 = vunpack.c.l.b16 %v223
    %v288 = vunpack.c.l.b16 %v224
    %v289 = vunpack.c.l.b16 %v225
    %v290 = vunpack.c.l.b16 %v226
    %v291 = vunpack.c.l.b16 %v227
    %v292 = vunpack.c.l.b16 %v228
    %v293 = vunpack.c.l.b16 %v229
    %v294 = vunpack.c.l.b16 %v230
    %v295 = vunpack.c.l.b16 %v231
    %v296 = vunpack.c.l.b16 %v232
    %v297 = vunpack.c.l.b16 %v233
    %v298 = vunpack.c.l.b16 %v234
    %v299 = vunpack.c.l.b16 %v235
    %v300 = vunpack.c.l.b16 %v236
    %v301 = vunpack.c.l.b16 %v237
    %v302 = vunpack.c.l.b16 %v238
    %v303 = vunpack.c.l.b16 %v239
    %v304 = vunpack.c.l.b16 %v240
    %v305 = vunpack.c.l.b16 %v241
    %v306 = vunpack.c.l.b16 %v242
    %v307 = vunpack.c.l.b16 %v243
    %v308 = vunpack.c.l.b16 %v244
    %v309 = vpack.c.b16 %v278, %v277
    %v310 = vpack.c.b16 %v280, %v279
    %v311 = vpack.c.b16 %v282, %v281
    %v312 = vpack.c.b16 %v284, %v283
    %v313 = vpack.c.b16 %v286, %v285
    %v314 = vpack.c.b16 %v288, %v287
    %v315 = vpack.c.b16 %v290, %v289
    %v316 = vpack.c.b16 %v292, %v291
    %v317 = vpack.c.b16 %v294, %v293
    %v318 = vpack.c.b16 %v296, %v295
    %v319 = vpack.c.b16 %v298, %v297
    %v320 = vpack.c.b16 %v300, %v299
    %v321 = vpack.c.b16 %v302, %v301
    %v322 = vpack.c.b16 %v304, %v303
    %v323 = vpack.c.b16 %v306, %v305
    %v324 = vpack.c.b16 %v308, %v307
    %341 = vmatprep.subr.bf16.mxu0 0
    %342 = vmatpush1.bf16.msra.mxu0 %v309
    %343 = vmatprep.subr.bf16.mxu0 0
    %344 = vmatpush1.bf16.msra.mxu0 %v310
    %345 = vmatprep.subr.bf16.mxu0 0
    %346 = vmatpush1.bf16.msra.mxu0 %v311
    %347 = vmatprep.subr.bf16.mxu0 0
    %348 = vmatpush1.bf16.msra.mxu0 %v312
    %349 = vmatprep.subr.bf16.mxu0 0
    %350 = vmatpush1.bf16.msra.mxu0 %v313
    %351 = vmatprep.subr.bf16.mxu0 0
    %352 = vmatpush1.bf16.msra.mxu0 %v314
    %353 = vmatprep.subr.bf16.mxu0 0
    %354 = vmatpush1.bf16.msra.mxu0 %v315
    %355 = vmatprep.subr.bf16.mxu0 0
    %356 = vmatpush1.bf16.msra.mxu0 %v316
    %357 = vmatprep.subr.bf16.mxu0 0
    %358 = vmatpush1.bf16.msra.mxu0 %v317
    %359 = vmatprep.subr.bf16.mxu0 0
    %360 = vmatpush1.bf16.msra.mxu0 %v318
    %361 = vmatprep.subr.bf16.mxu0 0
    %362 = vmatpush1.bf16.msra.mxu0 %v319
    %363 = vmatprep.subr.bf16.mxu0 0
    %364 = vmatpush1.bf16.msra.mxu0 %v320
    %365 = vmatprep.subr.bf16.mxu0 0
    %366 = vmatpush1.bf16.msra.mxu0 %v321
    %367 = vmatprep.subr.bf16.mxu0 0
    %368 = vmatpush1.bf16.msra.mxu0 %v322
    %369 = vmatprep.subr.bf16.mxu0 0
    %370 = vmatpush1.bf16.msra.mxu0 %v323
    %371 = vmatprep.subr.bf16.mxu0 0
    %372 = vmatpush1.bf16.msra.mxu0 %v324
    %373 = vmatprep.mubr.bf16.mxu0 %v212
    %374 = vmatmul.mubr.bf16.gmra.mrb[0].mxu0 %v211
    %v375 = vpop.f32.mrb[0].mxu0
    %v376 = vadd.f32 0.0, %v375
    %v377 = vpop.f32.mrb[0].mxu0
    %v378 = vpop.f32.mrb[0].mxu0
    %v379 = vadd.f32 0.0, %v378
    %v380 = vpop.f32.mrb[0].mxu0
    %381 = vdwg.mxu0
    %vm382 = vcmp.gt.f32.partialorder %v376, 0.0
    %vm383 = vcmp.gt.f32.partialorder %v379, 0.0
    %v384 = vmul.f32 %v376, 0.01
    %v385 = vmul.f32 %v379, 0.01
    %v386 = vsel %vm382, %v376, %v384
    %v387 = vsel %vm383, %v379, %v385
    %388 = vst [vmem:[#allocation8] sm:$0xff] %v386
    %389 = vst [vmem:[#allocation8 + $0x8] sm:$0xff] %v387
    // Predicated region
    $region26: #{mlp_forward.1} parent=1 // pred_check
      _
    $region27: #{mlp_forward.1} parent=1 // pred_check_branch
      %391 = sbr.rel (0) target = $region29
    $region28: #{mlp_forward.1} parent=1 // pred_region
      %s393 = ssub.s32 256, 256
      %394 = vsyncadd [#allocation4], %s393
      %s395 = sshll.u32 [#allocation8], 4
      %s396 = int_to_ptr.vmem [resolvable:$true] %s395
      %401 = dma.vmem_to_hbm [thread:$0]  %s396, 256, %s3, [#allocation4], 128, 128, 8
    $region29: #{mlp_forward.1} parent=1 // pred_fallthru
      _
    // Predicated region
    $region30: #{mlp_forward.1} parent=1 // pred_check
      _
    $region31: #{mlp_forward.1} parent=1 // pred_check_branch
      %403 = sbr.rel (0) target = $region33
    $region32: #{mlp_forward.1} parent=1 // pred_region
      %404 = dma.done [#allocation4], 256
    $region33: #{mlp_forward.1} parent=1 // pred_fallthru
      _
    %405 = vsyncpa [#allocation3], 1
    %406 = vsyncpa [#allocation6], 1
    %407 = vsyncpa [#allocation4], 1

</llo_original>
